<compile_context>
chip_gen: v7x
topology: tpu7x:2x2x1
jax: 0.10.0
libtpu: 0.0.40
codegen_flags: <defaults>
</compile_context>

<pallas_src>
import jax
import jax.numpy as jnp
import numpy as np
from jax.experimental import pallas as pl
from jax.experimental.pallas import tpu as pltpu

# ----------------------------- config ---------------------------------------
B = 2              # batch
C, H, W = 4, 16, 16
PATCH = 4
T = (H // PATCH) * (W // PATCH)          # 16 vit tokens
PATCH_DIM = C * PATCH * PATCH            # 64
CNN_IN = C * H * W                       # 1024 (flat NCHW features per branch)
CNN_DIM = 128                            # synthetic cnn num_features
VIT_DIM = 128                            # synthetic vit num_features
FUSION_DIM = CNN_DIM + VIT_DIM           # 256
FUSION_REDUCTION = 2
FUSED_DIM = FUSION_DIM // FUSION_REDUCTION  # 128
NUM_CLASSES = 30
OUT_PAD = 128                            # lane-dense padded class dim
SUBLANE_PAD = 16                         # bf16 sublane tile -> batch pad unit
MAX_TILE_B = 512                         # batch-tile cap (fits v7x 32 MiB scoped VMEM)
K_TOTAL = 2 * CNN_IN                     # 2048: stacked contraction dim


def _round_up(x, m):
    return ((x + m - 1) // m) * m


# ----------------------------- kernel ---------------------------------------
def hybrid_kernel(xc_ref, xv_ref, w_ref, b_ref, out_ref):
    # Inputs arrive f32 and are packed to bf16 on the VPU here (no wrapper-side
    # cast round-trip through HBM).
    xc = xc_ref[...].astype(jnp.bfloat16)            # (tb, 1024)
    xv = xv_ref[...].astype(jnp.bfloat16)            # (tb, 1024)

    # Both halves are 128-lane aligned -> concat is pure placement; together
    # with the stacked (2048, 128) bf16 weight the whole (fully folded, affine)
    # network is ONE MXU dot accumulating in f32.
    x = jnp.concatenate([xc, xv], axis=-1)           # (tb, 2048) bf16

    # --- dropout: inference-mode identity.
    # TODO(synk): training-mode nn.Dropout(p=0.1) RNG masking not implemented.
    logits = (jnp.dot(x, w_ref[...], preferred_element_type=jnp.float32)
              + b_ref[...])                          # (tb, 128) f32
    out_ref[...] = logits.astype(out_ref.dtype)


# ----------------------------- wrapper ---------------------------------------
def hybrid_forward(x_cnn_nchw, x_vit_nchw, kparams):
    b = x_cnn_nchw.shape[0]
    bp = _round_up(max(b, SUBLANE_PAD), SUBLANE_PAD)
    tb = min(bp, MAX_TILE_B)          # cap tile -> multi-step grid for big B
    bp = _round_up(bp, tb)            # pad batch to a whole number of tiles

    # Both branches read flat NCHW rows; the ViT patchify permutation, token
    # mean, fusion_fc and classifier all live inside the folded weight w12.
    xc = x_cnn_nchw.reshape(b, CNN_IN)
    xv = x_vit_nchw.reshape(b, CNN_IN)
    if bp != b:
        xc = jnp.pad(xc, ((0, bp - b), (0, 0)))
        xv = jnp.pad(xv, ((0, bp - b), (0, 0)))

    def const_spec(shape):   # constant block index -> VMEM-resident, single-buffered
        return pl.BlockSpec(shape, lambda i: (0, 0),
                            pipeline_mode=pl.Buffered(1))

    out = pl.pallas_call(
        hybrid_kernel,
        out_shape=jax.ShapeDtypeStruct((bp, OUT_PAD), jnp.float32),
        grid_spec=pltpu.PrefetchScalarGridSpec(
            num_scalar_prefetch=0,
            grid=(bp // tb,),
            in_specs=[
                pl.BlockSpec((tb, CNN_IN), lambda i: (i, 0)),   # xc  (f32)
                pl.BlockSpec((tb, CNN_IN), lambda i: (i, 0)),   # xv  (f32)
                const_spec((K_TOTAL, OUT_PAD)),                 # w12 (bf16)
                const_spec((1, OUT_PAD)),                       # b   (f32)
            ],
            out_specs=pl.BlockSpec((tb, OUT_PAD), lambda i: (i, 0)),
        ),
        compiler_params=pltpu.CompilerParams(
            dimension_semantics=("parallel",)),   # 2nd TensorCore on v7x
    )(xc, xv, kparams["w12"], kparams["b"])

    return out[:b, :NUM_CLASSES]


# ----------------------------- params ----------------------------------------
def init_params(key):
    ks = jax.random.split(key, 10)
    def lin(k, fan_in, shape):
        return jax.random.normal(k, shape, jnp.float32) / np.sqrt(fan_in)
    return {
        "wc":   lin(ks[0], CNN_IN,     (CNN_IN, CNN_DIM)),
        "bc":   lin(ks[1], CNN_IN,     (1, CNN_DIM)),
        "wv":   lin(ks[2], PATCH_DIM,  (PATCH_DIM, VIT_DIM)),
        "bv":   lin(ks[3], PATCH_DIM,  (1, VIT_DIM)),
        "wf":   lin(ks[4], FUSION_DIM, (FUSION_DIM, FUSED_DIM)),
        "bf":   lin(ks[5], FUSION_DIM, (1, FUSED_DIM)),
        "wcls": lin(ks[6], FUSED_DIM,  (FUSED_DIM, NUM_CLASSES)),
        "bcls": lin(ks[7], FUSED_DIM,  (1, NUM_CLASSES)),
    }


def fold_params(p):
    """Offline (one-time) algebraic folding of the HybridModel weights."""
    # ViT: fold the NCHW->patch permutation and the token mean (1/T) into the
    # projection weight.  For flat index chw = c*H*W + h*W + w the in-patch
    # feature index is d = ((h%P)*P + (w%P))*C + c (matches the reference
    # reshape/transpose), and the mean replicates wv rows scaled by 1/T.
    c = np.arange(C)[:, None, None]
    h = np.arange(H)[None, :, None]
    w = np.arange(W)[None, None, :]
    d = ((h % PATCH) * PATCH + (w % PATCH)) * C + c
    d = np.broadcast_to(d, (C, H, W)).reshape(-1)            # (CNN_IN,)
    wv_eff = p["wv"][d, :] / T                               # (CNN_IN, VIT_DIM)

    # Head: fusion_fc then classifier with no nonlinearity in between -> one
    # affine map, classes padded to 128 lanes.
    wcls_pad = jnp.pad(p["wcls"], ((0, 0), (0, OUT_PAD - NUM_CLASSES)))
    bcls_pad = jnp.pad(p["bcls"], ((0, 0), (0, OUT_PAD - NUM_CLASSES)))
    wh = p["wf"] @ wcls_pad                                  # (FUSION_DIM, 128)
    whc, whv = wh[:CNN_DIM, :], wh[CNN_DIM:, :]

    # Full end-to-end fold: the whole network is affine at inference, so fold
    # each branch projection through the head and stack along K so the kernel
    # is a single (B, 2048) @ (2048, 128) dot plus one bias.
    w1 = p["wc"] @ whc                                       # (CNN_IN, 128)
    w2 = wv_eff @ whv                                        # (CNN_IN, 128)
    bias = p["bc"] @ whc + p["bv"] @ whv + p["bf"] @ wcls_pad + bcls_pad  # (1,128)

    w12 = jnp.concatenate([w1, w2], axis=0).astype(jnp.bfloat16)  # (2048, 128)
    return {"w12": w12, "b": bias.astype(jnp.float32)}


# ----------------------------- reference (unfolded, f32) ----------------------
def reference_forward(x_cnn_nchw, x_vit_nchw, p):
    nb = x_cnn_nchw.shape[0]
    xc = x_cnn_nchw.reshape(nb, CNN_IN)
    xv = (x_vit_nchw
          .reshape(nb, C, H // PATCH, PATCH, W // PATCH, PATCH)
          .transpose(0, 2, 4, 3, 5, 1)
          .reshape(nb, T, PATCH_DIM))
    f_cnn = xc @ p["wc"] + p["bc"]
    f_vit = jnp.einsum('btd,de->bte', xv, p["wv"]).mean(axis=1) + p["bv"]
    feat = jnp.concatenate([f_cnn, f_vit], axis=1)
    fused = feat @ p["wf"] + p["bf"]
    return fused @ p["wcls"] + p["bcls"]


# ----------------------------- main -------------------------------------------
if __name__ == "__main__":
    key = jax.random.PRNGKey(0)
    k_cnn, k_vit, k_par = jax.random.split(key, 3)
    x_cnn = jax.random.normal(k_cnn, (B, C, H, W), jnp.float32)   # NCHW
    x_vit = jax.random.normal(k_vit, (B, C, H, W), jnp.float32)   # NCHW
    params = init_params(k_par)
    kparams = fold_params(params)

    out = hybrid_forward(x_cnn, x_vit, kparams)
    out = jax.block_until_ready(out)

    ref = reference_forward(x_cnn, x_vit, params)
    assert out.shape == (B, NUM_CLASSES)
    # bf16 folded weights + in-kernel bf16 input cast (f32 accumulation) ->
    # relaxed tolerance vs the pure-f32 unfolded reference.
    np.testing.assert_allclose(np.asarray(out), np.asarray(ref),
                               rtol=2e-2, atol=2e-2)
    print("KERNEL_OK")
</pallas_src>

<mosaic_0001>
module attributes {stable_mosaic.version = 11 : i64} {
  func.func @hybrid_kernel(%arg0: i32, %arg1: memref<16x1024xf32, #tpu.memory_space<vmem>>, %arg2: memref<16x1024xf32, #tpu.memory_space<vmem>>, %arg3: memref<2048x128xbf16, #tpu.memory_space<vmem>>, %arg4: memref<1x128xf32, #tpu.memory_space<vmem>>, %arg5: memref<16x128xf32, #tpu.memory_space<vmem>>) attributes {dimension_semantics = [#tpu.dimension_semantics<parallel>], iteration_bounds = array<i64: 1>, scalar_prefetch = 0 : i64, scratch_operands = 0 : i64, tpu.core_type = #tpu.core_type<tc>, window_params = [{transform_indices = @transform_0, window_bounds = array<i64: 16, 1024>}, {transform_indices = @transform_1, window_bounds = array<i64: 16, 1024>}, {pipeline_mode = #tpu.pipeline_mode<synchronous>, transform_indices = @transform_2, window_bounds = array<i64: 2048, 128>}, {pipeline_mode = #tpu.pipeline_mode<synchronous>, transform_indices = @transform_3, window_bounds = array<i64: 1, 128>}, {transform_indices = @transform_4, window_bounds = array<i64: 16, 128>}]} {
    %c0 = arith.constant 0 : index
    %c0_0 = arith.constant 0 : index
    %0 = vector.load %arg1[%c0, %c0_0] : memref<16x1024xf32, #tpu.memory_space<vmem>>, vector<16x1024xf32>
    %1 = arith.truncf %0 : vector<16x1024xf32> to vector<16x1024xbf16>
    %c0_1 = arith.constant 0 : index
    %c0_2 = arith.constant 0 : index
    %2 = vector.load %arg2[%c0_1, %c0_2] : memref<16x1024xf32, #tpu.memory_space<vmem>>, vector<16x1024xf32>
    %3 = arith.truncf %2 : vector<16x1024xf32> to vector<16x1024xbf16>
    %4 = tpu.concatenate %1, %3 in 1 : vector<16x1024xbf16>, vector<16x1024xbf16> -> vector<16x2048xbf16>
    %c0_3 = arith.constant 0 : index
    %c0_4 = arith.constant 0 : index
    %5 = vector.load %arg3[%c0_3, %c0_4] : memref<2048x128xbf16, #tpu.memory_space<vmem>>, vector<2048x128xbf16>
    %cst = arith.constant dense<0.000000e+00> : vector<16x128xf32>
    %6 = tpu.matmul %4, %5, %cst {dimension_numbers = #tpu.dot_dimension_numbers<[1], [0], [0], [1], [0, 0, 1, 1], [], []>} : vector<16x2048xbf16>, vector<2048x128xbf16>, vector<16x128xf32> -> vector<16x128xf32>
    %c0_5 = arith.constant 0 : index
    %c0_6 = arith.constant 0 : index
    %7 = vector.load %arg4[%c0_5, %c0_6] : memref<1x128xf32, #tpu.memory_space<vmem>>, vector<1x128xf32>
    %8 = vector.broadcast %7 : vector<1x128xf32> to vector<16x128xf32>
    %9 = arith.addf %6, %8 : vector<16x128xf32>
    %c0_7 = arith.constant 0 : index
    %c0_8 = arith.constant 0 : index
    %10 = vector.load %arg5[%c0_7, %c0_8] : memref<16x128xf32, #tpu.memory_space<vmem>>, vector<16x128xf32>
    tpu.vector_store %arg5[%c0_7, %c0_8], %9 {strides = array<i32>} : memref<16x128xf32, #tpu.memory_space<vmem>>, vector<16x128xf32>,
    return
  }
  func.func @transform_0(%arg0: i32) -> (i32, i32) {
    %c0_i32 = arith.constant 0 : i32
    %c0_i32_0 = arith.constant 0 : i32
    return %arg0, %c0_i32 : i32, i32
  }
  func.func @transform_1(%arg0: i32) -> (i32, i32) {
    %c0_i32 = arith.constant 0 : i32
    %c0_i32_0 = arith.constant 0 : i32
    return %arg0, %c0_i32 : i32, i32
  }
  func.func @transform_2(%arg0: i32) -> (i32, i32) {
    %c0_i32 = arith.constant 0 : i32
    %c0_i32_0 = arith.constant 0 : i32
    %c0_i32_1 = arith.constant 0 : i32
    return %c0_i32, %c0_i32_0 : i32, i32
  }
  func.func @transform_3(%arg0: i32) -> (i32, i32) {
    %c0_i32 = arith.constant 0 : i32
    %c0_i32_0 = arith.constant 0 : i32
    %c0_i32_1 = arith.constant 0 : i32
    return %c0_i32, %c0_i32_0 : i32, i32
  }
  func.func @transform_4(%arg0: i32) -> (i32, i32) {
    %c0_i32 = arith.constant 0 : i32
    %c0_i32_0 = arith.constant 0 : i32
    return %arg0, %c0_i32 : i32, i32
  }
}

</mosaic_0001>

<llo_original>
// kernel: tpu_custom_call.1
$region0: #{tpu_custom_call.1}
  #allocation0 [shape = 'u32[]', space=smem, size = 0x4, offset = 0x4, fixed_abs, tag = 'smem constant byte address 0x4 - core index']
  #allocation1 [shape = 'u32[144,128]{1,0:T(1,128)}', space=vmem, size = 0x12000, scoped, tag = 'internal scratch']
  %s0 = inlined_call_operand.hbm [shape: f32[16,1024], index: 0, kind: input, shape index: {}]
  %s1 = inlined_call_operand.hbm [shape: f32[16,1024], index: 1, kind: input, shape index: {}]
  %s2 = inlined_call_operand.hbm [shape: bf16[2048,128], index: 2, kind: input, shape index: {}]
  %s3 = inlined_call_operand.vmem [shape: f32[1,128], index: 3, kind: input, shape index: {}]
  %s4 = inlined_call_operand.hbm [shape: f32[16,128], index: 4, kind: output, shape index: {}]
  %s5 = sld [smem:[#allocation0]]
  $region38: #{tpu_custom_call.1} parent=0
    _
  %s7 = ssub.s32 1, %s5
  %s8 = scalar_select 0, %s7, %s5
  $region1: #{tpu_custom_call.1} parent=0
    #allocation2 [shape = 'u8[65536]{0}', space=vmem, size = 0x10000, scoped, tag = 'input window, operand 0, single buffered']
    #allocation3 [shape = 's32[1]{0}', space=sflag, size = 0x4, scoped, tag = 'scoped memory for tpu_custom_call.1']
    #allocation4 [shape = 's32[1]{0}', space=sflag, size = 0x4, scoped, tag = 'scoped memory for tpu_custom_call.1']
    #allocation5 [shape = 'u8[65536]{0}', space=vmem, size = 0x10000, scoped, tag = 'input window, operand 1, single buffered']
    #allocation6 [shape = 's32[1]{0}', space=sflag, size = 0x4, scoped, tag = 'scoped memory for tpu_custom_call.1']
    #allocation7 [shape = 'u8[524288]{0}', space=vmem, size = 0x80000, scoped, tag = 'input window, operand 2, single buffered']
    #allocation8 [shape = 'u8[8192]{0}', space=vmem, size = 0x2000, scoped, tag = 'output window, operand 0, single buffered']
    %9 = vsyncpa [#allocation3], 0
    %10 = vsyncpa [#allocation6], 0
    %11 = vsyncpa [#allocation4], 0
    // Predicated region
    $region2: #{tpu_custom_call.1} parent=1 // pred_check
      _
    $region3: #{tpu_custom_call.1} parent=1 // pred_check_branch
      %13 = sbr.rel (0) target = $region5
    $region4: #{tpu_custom_call.1} parent=1 // pred_region
      %s15 = ssub.s32 2048, 2048
      %16 = vsyncadd [#allocation3], %s15
      %s17 = sshll.u32 [#allocation2], 4
      %s18 = int_to_ptr.vmem [resolvable:$true] %s17
      %23 = dma.hbm_to_vmem [thread:$0]  %s0, 2048, %s18, [#allocation3], 1024, 1024, 64
    $region5: #{tpu_custom_call.1} parent=1 // pred_fallthru
      _
    // Predicated region
    $region6: #{tpu_custom_call.1} parent=1 // pred_check
      _
    $region7: #{tpu_custom_call.1} parent=1 // pred_check_branch
      %25 = sbr.rel (0) target = $region9
    $region8: #{tpu_custom_call.1} parent=1 // pred_region
      %s27 = ssub.s32 2048, 2048
      %28 = vsyncadd [#allocation6], %s27
      %s29 = sshll.u32 [#allocation5], 4
      %s30 = int_to_ptr.vmem [resolvable:$true] %s29
      %35 = dma.hbm_to_vmem [thread:$0]  %s1, 2048, %s30, [#allocation6], 1024, 1024, 64
    $region9: #{tpu_custom_call.1} parent=1 // pred_fallthru
      _
    // Predicated region
    $region10: #{tpu_custom_call.1} parent=1 // pred_check
      _
    $region11: #{tpu_custom_call.1} parent=1 // pred_check_branch
      %37 = sbr.rel (0) target = $region13
    $region12: #{tpu_custom_call.1} parent=1 // pred_region
      %s39 = ssub.s32 16384, 16384
      %40 = vsyncadd [#allocation6], %s39
      %s41 = sshll.u32 [#allocation7], 4
      %s42 = int_to_ptr.vmem [resolvable:$true] %s41
      %47 = dma.hbm_to_vmem [thread:$0]  %s2, 16384, %s42, [#allocation6], 64, 64, 4
    $region13: #{tpu_custom_call.1} parent=1 // pred_fallthru
      _
    // Predicated region
    $region14: #{tpu_custom_call.1} parent=1 // pred_check
      _
    $region15: #{tpu_custom_call.1} parent=1 // pred_check_branch
      %49 = sbr.rel (0) target = $region17
    $region16: #{tpu_custom_call.1} parent=1 // pred_region
      _
    $region17: #{tpu_custom_call.1} parent=1 // pred_fallthru
      _
    // Predicated region
    $region18: #{tpu_custom_call.1} parent=1 // pred_check
      _
    $region19: #{tpu_custom_call.1} parent=1 // pred_check_branch
      %51 = sbr.rel (0) target = $region21
    $region20: #{tpu_custom_call.1} parent=1 // pred_region
      %52 = dma.done [#allocation3], 2048
    $region21: #{tpu_custom_call.1} parent=1 // pred_fallthru
      _
    // Predicated region
    $region22: #{tpu_custom_call.1} parent=1 // pred_check
      _
    $region23: #{tpu_custom_call.1} parent=1 // pred_check_branch
      %54 = sbr.rel (0) target = $region25
    $region24: #{tpu_custom_call.1} parent=1 // pred_region
      %55 = dma.done [#allocation6], 2048
    $region25: #{tpu_custom_call.1} parent=1 // pred_fallthru
      _
    // Predicated region
    $region26: #{tpu_custom_call.1} parent=1 // pred_check
      _
    $region27: #{tpu_custom_call.1} parent=1 // pred_check_branch
      %57 = sbr.rel (0) target = $region29
    $region28: #{tpu_custom_call.1} parent=1 // pred_region
      %58 = dma.done [#allocation6], 16384
    $region29: #{tpu_custom_call.1} parent=1 // pred_fallthru
      _
    %v60 = vld [vmem:[#allocation2] sm:$0xff]
    %v61 = vld [vmem:[#allocation2 + $0x8] sm:$0xff]
    %v62 = vld [vmem:[#allocation2 + $0x10] sm:$0xff]
    %v63 = vld [vmem:[#allocation2 + $0x18] sm:$0xff]
    %v64 = vld [vmem:[#allocation2 + $0x20] sm:$0xff]
    %v65 = vld [vmem:[#allocation2 + $0x28] sm:$0xff]
    %v66 = vld [vmem:[#allocation2 + $0x30] sm:$0xff]
    %v67 = vld [vmem:[#allocation2 + $0x38] sm:$0xff]
    %v68 = vld [vmem:[#allocation2 + $0x40] sm:$0xff]
    %v69 = vld [vmem:[#allocation2 + $0x48] sm:$0xff]
    %v70 = vld [vmem:[#allocation2 + $0x50] sm:$0xff]
    %v71 = vld [vmem:[#allocation2 + $0x58] sm:$0xff]
    %v72 = vld [vmem:[#allocation2 + $0x60] sm:$0xff]
    %v73 = vld [vmem:[#allocation2 + $0x68] sm:$0xff]
    %v74 = vld [vmem:[#allocation2 + $0x70] sm:$0xff]
    %v75 = vld [vmem:[#allocation2 + $0x78] sm:$0xff]
    %v76 = vpack.c.bf16 %v68, %v60
    %v77 = vpack.c.bf16 %v69, %v61
    %v78 = vpack.c.bf16 %v70, %v62
    %v79 = vpack.c.bf16 %v71, %v63
    %v80 = vpack.c.bf16 %v72, %v64
    %v81 = vpack.c.bf16 %v73, %v65
    %v82 = vpack.c.bf16 %v74, %v66
    %v83 = vpack.c.bf16 %v75, %v67
    %v84 = vld [vmem:[#allocation5] sm:$0xff]
    %v85 = vld [vmem:[#allocation5 + $0x8] sm:$0xff]
    %v86 = vld [vmem:[#allocation5 + $0x10] sm:$0xff]
    %v87 = vld [vmem:[#allocation5 + $0x18] sm:$0xff]
    %v88 = vld [vmem:[#allocation5 + $0x20] sm:$0xff]
    %v89 = vld [vmem:[#allocation5 + $0x28] sm:$0xff]
    %v90 = vld [vmem:[#allocation5 + $0x30] sm:$0xff]
    %v91 = vld [vmem:[#allocation5 + $0x38] sm:$0xff]
    %v92 = vld [vmem:[#allocation5 + $0x40] sm:$0xff]
    %v93 = vld [vmem:[#allocation5 + $0x48] sm:$0xff]
    %v94 = vld [vmem:[#allocation5 + $0x50] sm:$0xff]
    %v95 = vld [vmem:[#allocation5 + $0x58] sm:$0xff]
    %v96 = vld [vmem:[#allocation5 + $0x60] sm:$0xff]
    %v97 = vld [vmem:[#allocation5 + $0x68] sm:$0xff]
    %v98 = vld [vmem:[#allocation5 + $0x70] sm:$0xff]
    %v99 = vld [vmem:[#allocation5 + $0x78] sm:$0xff]
    %v100 = vpack.c.bf16 %v92, %v84
    %v101 = vpack.c.bf16 %v93, %v85
    %v102 = vpack.c.bf16 %v94, %v86
    %v103 = vpack.c.bf16 %v95, %v87
    %v104 = vpack.c.bf16 %v96, %v88
    %v105 = vpack.c.bf16 %v97, %v89
    %v106 = vpack.c.bf16 %v98, %v90
    %v107 = vpack.c.bf16 %v99, %v91
    %v108 = vld [vmem:[#allocation7] sm:$0xf]
    %v109 = vld [vmem:[#allocation7 + $0x4] sm:$0xf]
    %v110 = vld [vmem:[#allocation7 + $0x8] sm:$0xf]
    %v111 = vld [vmem:[#allocation7 + $0xc] sm:$0xf]
    %v112 = vld [vmem:[#allocation7 + $0x10] sm:$0xf]
    %v113 = vld [vmem:[#allocation7 + $0x14] sm:$0xf]
    %v114 = vld [vmem:[#allocation7 + $0x18] sm:$0xf]
    %v115 = vld [vmem:[#allocation7 + $0x1c] sm:$0xf]
    %v116 = vld [vmem:[#allocation7 + $0x20] sm:$0xf]
    %v117 = vld [vmem:[#allocation7 + $0x24] sm:$0xf]
    %v118 = vld [vmem:[#allocation7 + $0x28] sm:$0xf]
    %v119 = vld [vmem:[#allocation7 + $0x2c] sm:$0xf]
    %v120 = vld [vmem:[#allocation7 + $0x30] sm:$0xf]
    %v121 = vld [vmem:[#allocation7 + $0x34] sm:$0xf]
    %v122 = vld [vmem:[#allocation7 + $0x38] sm:$0xf]
    %v123 = vld [vmem:[#allocation7 + $0x3c] sm:$0xf]
    %v124 = vld [vmem:[#allocation7 + $0x40] sm:$0xf]
    %v125 = vld [vmem:[#allocation7 + $0x44] sm:$0xf]
    %v126 = vld [vmem:[#allocation7 + $0x48] sm:$0xf]
    %v127 = vld [vmem:[#allocation7 + $0x4c] sm:$0xf]
    %v128 = vld [vmem:[#allocation7 + $0x50] sm:$0xf]
    %v129 = vld [vmem:[#allocation7 + $0x54] sm:$0xf]
    %v130 = vld [vmem:[#allocation7 + $0x58] sm:$0xf]
    %v131 = vld [vmem:[#allocation7 + $0x5c] sm:$0xf]
    %v132 = vld [vmem:[#allocation7 + $0x60] sm:$0xf]
    %v133 = vld [vmem:[#allocation7 + $0x64] sm:$0xf]
    %v134 = vld [vmem:[#allocation7 + $0x68] sm:$0xf]
    %v135 = vld [vmem:[#allocation7 + $0x6c] sm:$0xf]
    %v136 = vld [vmem:[#allocation7 + $0x70] sm:$0xf]
    %v137 = vld [vmem:[#allocation7 + $0x74] sm:$0xf]
    %v138 = vld [vmem:[#allocation7 + $0x78] sm:$0xf]
    %v139 = vld [vmem:[#allocation7 + $0x7c] sm:$0xf]
    %v140 = vld [vmem:[#allocation7 + $0x80] sm:$0xf]
    %v141 = vld [vmem:[#allocation7 + $0x84] sm:$0xf]
    %v142 = vld [vmem:[#allocation7 + $0x88] sm:$0xf]
    %v143 = vld [vmem:[#allocation7 + $0x8c] sm:$0xf]
    %v144 = vld [vmem:[#allocation7 + $0x90] sm:$0xf]
    %v145 = vld [vmem:[#allocation7 + $0x94] sm:$0xf]
    %v146 = vld [vmem:[#allocation7 + $0x98] sm:$0xf]
    %v147 = vld [vmem:[#allocation7 + $0x9c] sm:$0xf]
    %v148 = vld [vmem:[#allocation7 + $0xa0] sm:$0xf]
    %v149 = vld [vmem:[#allocation7 + $0xa4] sm:$0xf]
    %v150 = vld [vmem:[#allocation7 + $0xa8] sm:$0xf]
    %v151 = vld [vmem:[#allocation7 + $0xac] sm:$0xf]
    %v152 = vld [vmem:[#allocation7 + $0xb0] sm:$0xf]
    %v153 = vld [vmem:[#allocation7 + $0xb4] sm:$0xf]
    %v154 = vld [vmem:[#allocation7 + $0xb8] sm:$0xf]
    %v155 = vld [vmem:[#allocation7 + $0xbc] sm:$0xf]
    %v156 = vld [vmem:[#allocation7 + $0xc0] sm:$0xf]
    %v157 = vld [vmem:[#allocation7 + $0xc4] sm:$0xf]
    %v158 = vld [vmem:[#allocation7 + $0xc8] sm:$0xf]
    %v159 = vld [vmem:[#allocation7 + $0xcc] sm:$0xf]
    %v160 = vld [vmem:[#allocation7 + $0xd0] sm:$0xf]
    %v161 = vld [vmem:[#allocation7 + $0xd4] sm:$0xf]
    %v162 = vld [vmem:[#allocation7 + $0xd8] sm:$0xf]
    %v163 = vld [vmem:[#allocation7 + $0xdc] sm:$0xf]
    %v164 = vld [vmem:[#allocation7 + $0xe0] sm:$0xf]
    %v165 = vld [vmem:[#allocation7 + $0xe4] sm:$0xf]
    %v166 = vld [vmem:[#allocation7 + $0xe8] sm:$0xf]
    %v167 = vld [vmem:[#allocation7 + $0xec] sm:$0xf]
    %v168 = vld [vmem:[#allocation7 + $0xf0] sm:$0xf]
    %v169 = vld [vmem:[#allocation7 + $0xf4] sm:$0xf]
    %v170 = vld [vmem:[#allocation7 + $0xf8] sm:$0xf]
    %v171 = vld [vmem:[#allocation7 + $0xfc] sm:$0xf]
    %v172 = vld [vmem:[#allocation7 + $0x100] sm:$0xf]
    %v173 = vld [vmem:[#allocation7 + $0x104] sm:$0xf]
    %v174 = vld [vmem:[#allocation7 + $0x108] sm:$0xf]
    %v175 = vld [vmem:[#allocation7 + $0x10c] sm:$0xf]
    %v176 = vld [vmem:[#allocation7 + $0x110] sm:$0xf]
    %v177 = vld [vmem:[#allocation7 + $0x114] sm:$0xf]
    %v178 = vld [vmem:[#allocation7 + $0x118] sm:$0xf]
    %v179 = vld [vmem:[#allocation7 + $0x11c] sm:$0xf]
    %v180 = vld [vmem:[#allocation7 + $0x120] sm:$0xf]
    %v181 = vld [vmem:[#allocation7 + $0x124] sm:$0xf]
    %v182 = vld [vmem:[#allocation7 + $0x128] sm:$0xf]
    %v183 = vld [vmem:[#allocation7 + $0x12c] sm:$0xf]
    %v184 = vld [vmem:[#allocation7 + $0x130] sm:$0xf]
    %v185 = vld [vmem:[#allocation7 + $0x134] sm:$0xf]
    %v186 = vld [vmem:[#allocation7 + $0x138] sm:$0xf]
    %v187 = vld [vmem:[#allocation7 + $0x13c] sm:$0xf]
    %v188 = vld [vmem:[#allocation7 + $0x140] sm:$0xf]
    %v189 = vld [vmem:[#allocation7 + $0x144] sm:$0xf]
    %v190 = vld [vmem:[#allocation7 + $0x148] sm:$0xf]
    %v191 = vld [vmem:[#allocation7 + $0x14c] sm:$0xf]
    %v192 = vld [vmem:[#allocation7 + $0x150] sm:$0xf]
    %v193 = vld [vmem:[#allocation7 + $0x154] sm:$0xf]
    %v194 = vld [vmem:[#allocation7 + $0x158] sm:$0xf]
    %v195 = vld [vmem:[#allocation7 + $0x15c] sm:$0xf]
    %v196 = vld [vmem:[#allocation7 + $0x160] sm:$0xf]
    %v197 = vld [vmem:[#allocation7 + $0x164] sm:$0xf]
    %v198 = vld [vmem:[#allocation7 + $0x168] sm:$0xf]
    %v199 = vld [vmem:[#allocation7 + $0x16c] sm:$0xf]
    %v200 = vld [vmem:[#allocation7 + $0x170] sm:$0xf]
    %v201 = vld [vmem:[#allocation7 + $0x174] sm:$0xf]
    %v202 = vld [vmem:[#allocation7 + $0x178] sm:$0xf]
    %v203 = vld [vmem:[#allocation7 + $0x17c] sm:$0xf]
    %v204 = vld [vmem:[#allocation7 + $0x180] sm:$0xf]
    %v205 = vld [vmem:[#allocation7 + $0x184] sm:$0xf]
    %v206 = vld [vmem:[#allocation7 + $0x188] sm:$0xf]
    %v207 = vld [vmem:[#allocation7 + $0x18c] sm:$0xf]
    %v208 = vld [vmem:[#allocation7 + $0x190] sm:$0xf]
    %v209 = vld [vmem:[#allocation7 + $0x194] sm:$0xf]
    %v210 = vld [vmem:[#allocation7 + $0x198] sm:$0xf]
    %v211 = vld [vmem:[#allocation7 + $0x19c] sm:$0xf]
    %v212 = vld [vmem:[#allocation7 + $0x1a0] sm:$0xf]
    %v213 = vld [vmem:[#allocation7 + $0x1a4] sm:$0xf]
    %v214 = vld [vmem:[#allocation7 + $0x1a8] sm:$0xf]
    %v215 = vld [vmem:[#allocation7 + $0x1ac] sm:$0xf]
    %v216 = vld [vmem:[#allocation7 + $0x1b0] sm:$0xf]
    %v217 = vld [vmem:[#allocation7 + $0x1b4] sm:$0xf]
    %v218 = vld [vmem:[#allocation7 + $0x1b8] sm:$0xf]
    %v219 = vld [vmem:[#allocation7 + $0x1bc] sm:$0xf]
    %v220 = vld [vmem:[#allocation7 + $0x1c0] sm:$0xf]
    %v221 = vld [vmem:[#allocation7 + $0x1c4] sm:$0xf]
    %v222 = vld [vmem:[#allocation7 + $0x1c8] sm:$0xf]
    %v223 = vld [vmem:[#allocation7 + $0x1cc] sm:$0xf]
    %v224 = vld [vmem:[#allocation7 + $0x1d0] sm:$0xf]
    %v225 = vld [vmem:[#allocation7 + $0x1d4] sm:$0xf]
    %v226 = vld [vmem:[#allocation7 + $0x1d8] sm:$0xf]
    %v227 = vld [vmem:[#allocation7 + $0x1dc] sm:$0xf]
    %v228 = vld [vmem:[#allocation7 + $0x1e0] sm:$0xf]
    %v229 = vld [vmem:[#allocation7 + $0x1e4] sm:$0xf]
    %v230 = vld [vmem:[#allocation7 + $0x1e8] sm:$0xf]
    %v231 = vld [vmem:[#allocation7 + $0x1ec] sm:$0xf]
    %v232 = vld [vmem:[#allocation7 + $0x1f0] sm:$0xf]
    %v233 = vld [vmem:[#allocation7 + $0x1f4] sm:$0xf]
    %v234 = vld [vmem:[#allocation7 + $0x1f8] sm:$0xf]
    %v235 = vld [vmem:[#allocation7 + $0x1fc] sm:$0xf]
    %v236 = vld [vmem:[#allocation7 + $0x200] sm:$0xf]
    %v237 = vld [vmem:[#allocation7 + $0x204] sm:$0xf]
    %v238 = vld [vmem:[#allocation7 + $0x208] sm:$0xf]
    %v239 = vld [vmem:[#allocation7 + $0x20c] sm:$0xf]
    %v240 = vld [vmem:[#allocation7 + $0x210] sm:$0xf]
    %v241 = vld [vmem:[#allocation7 + $0x214] sm:$0xf]
    %v242 = vld [vmem:[#allocation7 + $0x218] sm:$0xf]
    %v243 = vld [vmem:[#allocation7 + $0x21c] sm:$0xf]
    %v244 = vld [vmem:[#allocation7 + $0x220] sm:$0xf]
    %v245 = vld [vmem:[#allocation7 + $0x224] sm:$0xf]
    %v246 = vld [vmem:[#allocation7 + $0x228] sm:$0xf]
    %v247 = vld [vmem:[#allocation7 + $0x22c] sm:$0xf]
    %v248 = vld [vmem:[#allocation7 + $0x230] sm:$0xf]
    %v249 = vld [vmem:[#allocation7 + $0x234] sm:$0xf]
    %v250 = vld [vmem:[#allocation7 + $0x238] sm:$0xf]
    %v251 = vld [vmem:[#allocation7 + $0x23c] sm:$0xf]
    %v252 = vld [vmem:[#allocation7 + $0x240] sm:$0xf]
    %v253 = vld [vmem:[#allocation7 + $0x244] sm:$0xf]
    %v254 = vld [vmem:[#allocation7 + $0x248] sm:$0xf]
    %v255 = vld [vmem:[#allocation7 + $0x24c] sm:$0xf]
    %v256 = vld [vmem:[#allocation7 + $0x250] sm:$0xf]
    %v257 = vld [vmem:[#allocation7 + $0x254] sm:$0xf]
    %v258 = vld [vmem:[#allocation7 + $0x258] sm:$0xf]
    %v259 = vld [vmem:[#allocation7 + $0x25c] sm:$0xf]
    %v260 = vld [vmem:[#allocation7 + $0x260] sm:$0xf]
    %v261 = vld [vmem:[#allocation7 + $0x264] sm:$0xf]
    %v262 = vld [vmem:[#allocation7 + $0x268] sm:$0xf]
    %v263 = vld [vmem:[#allocation7 + $0x26c] sm:$0xf]
    %v264 = vld [vmem:[#allocation7 + $0x270] sm:$0xf]
    %v265 = vld [vmem:[#allocation7 + $0x274] sm:$0xf]
    %v266 = vld [vmem:[#allocation7 + $0x278] sm:$0xf]
    %v267 = vld [vmem:[#allocation7 + $0x27c] sm:$0xf]
    %v268 = vld [vmem:[#allocation7 + $0x280] sm:$0xf]
    %v269 = vld [vmem:[#allocation7 + $0x284] sm:$0xf]
    %v270 = vld [vmem:[#allocation7 + $0x288] sm:$0xf]
    %v271 = vld [vmem:[#allocation7 + $0x28c] sm:$0xf]
    %v272 = vld [vmem:[#allocation7 + $0x290] sm:$0xf]
    %v273 = vld [vmem:[#allocation7 + $0x294] sm:$0xf]
    %v274 = vld [vmem:[#allocation7 + $0x298] sm:$0xf]
    %v275 = vld [vmem:[#allocation7 + $0x29c] sm:$0xf]
    %v276 = vld [vmem:[#allocation7 + $0x2a0] sm:$0xf]
    %v277 = vld [vmem:[#allocation7 + $0x2a4] sm:$0xf]
    %v278 = vld [vmem:[#allocation7 + $0x2a8] sm:$0xf]
    %v279 = vld [vmem:[#allocation7 + $0x2ac] sm:$0xf]
    %v280 = vld [vmem:[#allocation7 + $0x2b0] sm:$0xf]
    %v281 = vld [vmem:[#allocation7 + $0x2b4] sm:$0xf]
    %v282 = vld [vmem:[#allocation7 + $0x2b8] sm:$0xf]
    %v283 = vld [vmem:[#allocation7 + $0x2bc] sm:$0xf]
    %v284 = vld [vmem:[#allocation7 + $0x2c0] sm:$0xf]
    %v285 = vld [vmem:[#allocation7 + $0x2c4] sm:$0xf]
    %v286 = vld [vmem:[#allocation7 + $0x2c8] sm:$0xf]
    %v287 = vld [vmem:[#allocation7 + $0x2cc] sm:$0xf]
    %v288 = vld [vmem:[#allocation7 + $0x2d0] sm:$0xf]
    %v289 = vld [vmem:[#allocation7 + $0x2d4] sm:$0xf]
    %v290 = vld [vmem:[#allocation7 + $0x2d8] sm:$0xf]
    %v291 = vld [vmem:[#allocation7 + $0x2dc] sm:$0xf]
    %v292 = vld [vmem:[#allocation7 + $0x2e0] sm:$0xf]
    %v293 = vld [vmem:[#allocation7 + $0x2e4] sm:$0xf]
    %v294 = vld [vmem:[#allocation7 + $0x2e8] sm:$0xf]
    %v295 = vld [vmem:[#allocation7 + $0x2ec] sm:$0xf]
    %v296 = vld [vmem:[#allocation7 + $0x2f0] sm:$0xf]
    %v297 = vld [vmem:[#allocation7 + $0x2f4] sm:$0xf]
    %v298 = vld [vmem:[#allocation7 + $0x2f8] sm:$0xf]
    %v299 = vld [vmem:[#allocation7 + $0x2fc] sm:$0xf]
    %v300 = vld [vmem:[#allocation7 + $0x300] sm:$0xf]
    %v301 = vld [vmem:[#allocation7 + $0x304] sm:$0xf]
    %v302 = vld [vmem:[#allocation7 + $0x308] sm:$0xf]
    %v303 = vld [vmem:[#allocation7 + $0x30c] sm:$0xf]
    %v304 = vld [vmem:[#allocation7 + $0x310] sm:$0xf]
    %v305 = vld [vmem:[#allocation7 + $0x314] sm:$0xf]
    %v306 = vld [vmem:[#allocation7 + $0x318] sm:$0xf]
    %v307 = vld [vmem:[#allocation7 + $0x31c] sm:$0xf]
    %v308 = vld [vmem:[#allocation7 + $0x320] sm:$0xf]
    %v309 = vld [vmem:[#allocation7 + $0x324] sm:$0xf]
    %v310 = vld [vmem:[#allocation7 + $0x328] sm:$0xf]
    %v311 = vld [vmem:[#allocation7 + $0x32c] sm:$0xf]
    %v312 = vld [vmem:[#allocation7 + $0x330] sm:$0xf]
    %v313 = vld [vmem:[#allocation7 + $0x334] sm:$0xf]
    %v314 = vld [vmem:[#allocation7 + $0x338] sm:$0xf]
    %v315 = vld [vmem:[#allocation7 + $0x33c] sm:$0xf]
    %v316 = vld [vmem:[#allocation7 + $0x340] sm:$0xf]
    %v317 = vld [vmem:[#allocation7 + $0x344] sm:$0xf]
    %v318 = vld [vmem:[#allocation7 + $0x348] sm:$0xf]
    %v319 = vld [vmem:[#allocation7 + $0x34c] sm:$0xf]
    %v320 = vld [vmem:[#allocation7 + $0x350] sm:$0xf]
    %v321 = vld [vmem:[#allocation7 + $0x354] sm:$0xf]
    %v322 = vld [vmem:[#allocation7 + $0x358] sm:$0xf]
    %v323 = vld [vmem:[#allocation7 + $0x35c] sm:$0xf]
    %v324 = vld [vmem:[#allocation7 + $0x360] sm:$0xf]
    %v325 = vld [vmem:[#allocation7 + $0x364] sm:$0xf]
    %v326 = vld [vmem:[#allocation7 + $0x368] sm:$0xf]
    %v327 = vld [vmem:[#allocation7 + $0x36c] sm:$0xf]
    %v328 = vld [vmem:[#allocation7 + $0x370] sm:$0xf]
    %v329 = vld [vmem:[#allocation7 + $0x374] sm:$0xf]
    %v330 = vld [vmem:[#allocation7 + $0x378] sm:$0xf]
    %v331 = vld [vmem:[#allocation7 + $0x37c] sm:$0xf]
    %v332 = vld [vmem:[#allocation7 + $0x380] sm:$0xf]
    %v333 = vld [vmem:[#allocation7 + $0x384] sm:$0xf]
    %v334 = vld [vmem:[#allocation7 + $0x388] sm:$0xf]
    %v335 = vld [vmem:[#allocation7 + $0x38c] sm:$0xf]
    %v336 = vld [vmem:[#allocation7 + $0x390] sm:$0xf]
    %v337 = vld [vmem:[#allocation7 + $0x394] sm:$0xf]
    %v338 = vld [vmem:[#allocation7 + $0x398] sm:$0xf]
    %v339 = vld [vmem:[#allocation7 + $0x39c] sm:$0xf]
    %v340 = vld [vmem:[#allocation7 + $0x3a0] sm:$0xf]
    %v341 = vld [vmem:[#allocation7 + $0x3a4] sm:$0xf]
    %v342 = vld [vmem:[#allocation7 + $0x3a8] sm:$0xf]
    %v343 = vld [vmem:[#allocation7 + $0x3ac] sm:$0xf]
    %v344 = vld [vmem:[#allocation7 + $0x3b0] sm:$0xf]
    %v345 = vld [vmem:[#allocation7 + $0x3b4] sm:$0xf]
    %v346 = vld [vmem:[#allocation7 + $0x3b8] sm:$0xf]
    %v347 = vld [vmem:[#allocation7 + $0x3bc] sm:$0xf]
    %v348 = vld [vmem:[#allocation7 + $0x3c0] sm:$0xf]
    %v349 = vld [vmem:[#allocation7 + $0x3c4] sm:$0xf]
    %v350 = vld [vmem:[#allocation7 + $0x3c8] sm:$0xf]
    %v351 = vld [vmem:[#allocation7 + $0x3cc] sm:$0xf]
    %v352 = vld [vmem:[#allocation7 + $0x3d0] sm:$0xf]
    %v353 = vld [vmem:[#allocation7 + $0x3d4] sm:$0xf]
    %v354 = vld [vmem:[#allocation7 + $0x3d8] sm:$0xf]
    %v355 = vld [vmem:[#allocation7 + $0x3dc] sm:$0xf]
    %v356 = vld [vmem:[#allocation7 + $0x3e0] sm:$0xf]
    %v357 = vld [vmem:[#allocation7 + $0x3e4] sm:$0xf]
    %v358 = vld [vmem:[#allocation7 + $0x3e8] sm:$0xf]
    %v359 = vld [vmem:[#allocation7 + $0x3ec] sm:$0xf]
    %v360 = vld [vmem:[#allocation7 + $0x3f0] sm:$0xf]
    %v361 = vld [vmem:[#allocation7 + $0x3f4] sm:$0xf]
    %v362 = vld [vmem:[#allocation7 + $0x3f8] sm:$0xf]
    %v363 = vld [vmem:[#allocation7 + $0x3fc] sm:$0xf]
    %v364 = vld [vmem:[%s3] sm:$0x1]
    %v366 = vlaneseq
    %v367 = vshrl.u32 %v366, 7
    %v368 = vsub.s32 0, %v367
    %v369 = vrot.slane %v364, %v368
    %v627 = vunpack.c.l.b16 %v108
    %v628 = vunpack.c.l.b16 %v109
    %v629 = vunpack.c.l.b16 %v110
    %v630 = vunpack.c.l.b16 %v111
    %v631 = vunpack.c.l.b16 %v112
    %v632 = vunpack.c.l.b16 %v113
    %v633 = vunpack.c.l.b16 %v114
    %v634 = vunpack.c.l.b16 %v115
    %v635 = vunpack.c.l.b16 %v116
    %v636 = vunpack.c.l.b16 %v117
    %v637 = vunpack.c.l.b16 %v118
    %v638 = vunpack.c.l.b16 %v119
    %v639 = vunpack.c.l.b16 %v120
    %v640 = vunpack.c.l.b16 %v121
    %v641 = vunpack.c.l.b16 %v122
    %v642 = vunpack.c.l.b16 %v123
    %v643 = vunpack.c.l.b16 %v124
    %v644 = vunpack.c.l.b16 %v125
    %v645 = vunpack.c.l.b16 %v126
    %v646 = vunpack.c.l.b16 %v127
    %v647 = vunpack.c.l.b16 %v128
    %v648 = vunpack.c.l.b16 %v129
    %v649 = vunpack.c.l.b16 %v130
    %v650 = vunpack.c.l.b16 %v131
    %v651 = vunpack.c.l.b16 %v132
    %v652 = vunpack.c.l.b16 %v133
    %v653 = vunpack.c.l.b16 %v134
    %v654 = vunpack.c.l.b16 %v135
    %v655 = vunpack.c.l.b16 %v136
    %v656 = vunpack.c.l.b16 %v137
    %v657 = vunpack.c.l.b16 %v138
    %v658 = vunpack.c.l.b16 %v139
    %v659 = vunpack.c.l.b16 %v140
    %v660 = vunpack.c.l.b16 %v141
    %v661 = vunpack.c.l.b16 %v142
    %v662 = vunpack.c.l.b16 %v143
    %v663 = vunpack.c.l.b16 %v144
    %v664 = vunpack.c.l.b16 %v145
    %v665 = vunpack.c.l.b16 %v146
    %v666 = vunpack.c.l.b16 %v147
    %v667 = vunpack.c.l.b16 %v148
    %v668 = vunpack.c.l.b16 %v149
    %v669 = vunpack.c.l.b16 %v150
    %v670 = vunpack.c.l.b16 %v151
    %v671 = vunpack.c.l.b16 %v152
    %v672 = vunpack.c.l.b16 %v153
    %v673 = vunpack.c.l.b16 %v154
    %v674 = vunpack.c.l.b16 %v155
    %v675 = vunpack.c.l.b16 %v156
    %v676 = vunpack.c.l.b16 %v157
    %v677 = vunpack.c.l.b16 %v158
    %v678 = vunpack.c.l.b16 %v159
    %v679 = vunpack.c.l.b16 %v160
    %v680 = vunpack.c.l.b16 %v161
    %v681 = vunpack.c.l.b16 %v162
    %v682 = vunpack.c.l.b16 %v163
    %v683 = vunpack.c.l.b16 %v164
    %v684 = vunpack.c.l.b16 %v165
    %v685 = vunpack.c.l.b16 %v166
    %v686 = vunpack.c.l.b16 %v167
    %v687 = vunpack.c.l.b16 %v168
    %v688 = vunpack.c.l.b16 %v169
    %v689 = vunpack.c.l.b16 %v170
    %v690 = vunpack.c.l.b16 %v171
    %v691 = vunpack.c.l.b16 %v172
    %v692 = vunpack.c.l.b16 %v173
    %v693 = vunpack.c.l.b16 %v174
    %v694 = vunpack.c.l.b16 %v175
    %v695 = vunpack.c.l.b16 %v176
    %v696 = vunpack.c.l.b16 %v177
    %v697 = vunpack.c.l.b16 %v178
    %v698 = vunpack.c.l.b16 %v179
    %v699 = vunpack.c.l.b16 %v180
    %v700 = vunpack.c.l.b16 %v181
    %v701 = vunpack.c.l.b16 %v182
    %v702 = vunpack.c.l.b16 %v183
    %v703 = vunpack.c.l.b16 %v184
    %v704 = vunpack.c.l.b16 %v185
    %v705 = vunpack.c.l.b16 %v186
    %v706 = vunpack.c.l.b16 %v187
    %v707 = vunpack.c.l.b16 %v188
    %v708 = vunpack.c.l.b16 %v189
    %v709 = vunpack.c.l.b16 %v190
    %v710 = vunpack.c.l.b16 %v191
    %v711 = vunpack.c.l.b16 %v192
    %v712 = vunpack.c.l.b16 %v193
    %v713 = vunpack.c.l.b16 %v194
    %v714 = vunpack.c.l.b16 %v195
    %v715 = vunpack.c.l.b16 %v196
    %v716 = vunpack.c.l.b16 %v197
    %v717 = vunpack.c.l.b16 %v198
    %v718 = vunpack.c.l.b16 %v199
    %v719 = vunpack.c.l.b16 %v200
    %v720 = vunpack.c.l.b16 %v201
    %v721 = vunpack.c.l.b16 %v202
    %v722 = vunpack.c.l.b16 %v203
    %v723 = vunpack.c.l.b16 %v204
    %v724 = vunpack.c.l.b16 %v205
    %v725 = vunpack.c.l.b16 %v206
    %v726 = vunpack.c.l.b16 %v207
    %v727 = vunpack.c.l.b16 %v208
    %v728 = vunpack.c.l.b16 %v209
    %v729 = vunpack.c.l.b16 %v210
    %v730 = vunpack.c.l.b16 %v211
    %v731 = vunpack.c.l.b16 %v212
    %v732 = vunpack.c.l.b16 %v213
    %v733 = vunpack.c.l.b16 %v214
    %v734 = vunpack.c.l.b16 %v215
    %v735 = vunpack.c.l.b16 %v216
    %v736 = vunpack.c.l.b16 %v217
    %v737 = vunpack.c.l.b16 %v218
    %v738 = vunpack.c.l.b16 %v219
    %v739 = vunpack.c.l.b16 %v220
    %v740 = vunpack.c.l.b16 %v221
    %v741 = vunpack.c.l.b16 %v222
    %v742 = vunpack.c.l.b16 %v223
    %v743 = vunpack.c.l.b16 %v224
    %v744 = vunpack.c.l.b16 %v225
    %v745 = vunpack.c.l.b16 %v226
    %v746 = vunpack.c.l.b16 %v227
    %v747 = vunpack.c.l.b16 %v228
    %v748 = vunpack.c.l.b16 %v229
    %v749 = vunpack.c.l.b16 %v230
    %v750 = vunpack.c.l.b16 %v231
    %v751 = vunpack.c.l.b16 %v232
    %v752 = vunpack.c.l.b16 %v233
    %v753 = vunpack.c.l.b16 %v234
    %v754 = vunpack.c.l.b16 %v235
    %v755 = vunpack.c.l.b16 %v236
    %v756 = vunpack.c.l.b16 %v237
    %v757 = vunpack.c.l.b16 %v238
    %v758 = vunpack.c.l.b16 %v239
    %v759 = vunpack.c.l.b16 %v240
    %v760 = vunpack.c.l.b16 %v241
    %v761 = vunpack.c.l.b16 %v242
    %v762 = vunpack.c.l.b16 %v243
    %v763 = vunpack.c.l.b16 %v244
    %v764 = vunpack.c.l.b16 %v245
    %v765 = vunpack.c.l.b16 %v246
    %v766 = vunpack.c.l.b16 %v247
    %v767 = vunpack.c.l.b16 %v248
    %v768 = vunpack.c.l.b16 %v249
    %v769 = vunpack.c.l.b16 %v250
    %v770 = vunpack.c.l.b16 %v251
    %v771 = vunpack.c.l.b16 %v252
    %v772 = vunpack.c.l.b16 %v253
    %v773 = vunpack.c.l.b16 %v254
    %v774 = vunpack.c.l.b16 %v255
    %v775 = vunpack.c.l.b16 %v256
    %v776 = vunpack.c.l.b16 %v257
    %v777 = vunpack.c.l.b16 %v258
    %v778 = vunpack.c.l.b16 %v259
    %v779 = vunpack.c.l.b16 %v260
    %v780 = vunpack.c.l.b16 %v261
    %v781 = vunpack.c.l.b16 %v262
    %v782 = vunpack.c.l.b16 %v263
    %v783 = vunpack.c.l.b16 %v264
    %v784 = vunpack.c.l.b16 %v265
    %v785 = vunpack.c.l.b16 %v266
    %v786 = vunpack.c.l.b16 %v267
    %v787 = vunpack.c.l.b16 %v268
    %v788 = vunpack.c.l.b16 %v269
    %v789 = vunpack.c.l.b16 %v270
    %v790 = vunpack.c.l.b16 %v271
    %v791 = vunpack.c.l.b16 %v272
    %v792 = vunpack.c.l.b16 %v273
    %v793 = vunpack.c.l.b16 %v274
    %v794 = vunpack.c.l.b16 %v275
    %v795 = vunpack.c.l.b16 %v276
    %v796 = vunpack.c.l.b16 %v277
    %v797 = vunpack.c.l.b16 %v278
    %v798 = vunpack.c.l.b16 %v279
    %v799 = vunpack.c.l.b16 %v280
    %v800 = vunpack.c.l.b16 %v281
    %v801 = vunpack.c.l.b16 %v282
    %v802 = vunpack.c.l.b16 %v283
    %v803 = vunpack.c.l.b16 %v284
    %v804 = vunpack.c.l.b16 %v285
    %v805 = vunpack.c.l.b16 %v286
    %v806 = vunpack.c.l.b16 %v287
    %v807 = vunpack.c.l.b16 %v288
    %v808 = vunpack.c.l.b16 %v289
    %v809 = vunpack.c.l.b16 %v290
    %v810 = vunpack.c.l.b16 %v291
    %v811 = vunpack.c.l.b16 %v292
    %v812 = vunpack.c.l.b16 %v293
    %v813 = vunpack.c.l.b16 %v294
    %v814 = vunpack.c.l.b16 %v295
    %v815 = vunpack.c.l.b16 %v296
    %v816 = vunpack.c.l.b16 %v297
    %v817 = vunpack.c.l.b16 %v298
    %v818 = vunpack.c.l.b16 %v299
    %v819 = vunpack.c.l.b16 %v300
    %v820 = vunpack.c.l.b16 %v301
    %v821 = vunpack.c.l.b16 %v302
    %v822 = vunpack.c.l.b16 %v303
    %v823 = vunpack.c.l.b16 %v304
    %v824 = vunpack.c.l.b16 %v305
    %v825 = vunpack.c.l.b16 %v306
    %v826 = vunpack.c.l.b16 %v307
    %v827 = vunpack.c.l.b16 %v308
    %v828 = vunpack.c.l.b16 %v309
    %v829 = vunpack.c.l.b16 %v310
    %v830 = vunpack.c.l.b16 %v311
    %v831 = vunpack.c.l.b16 %v312
    %v832 = vunpack.c.l.b16 %v313
    %v833 = vunpack.c.l.b16 %v314
    %v834 = vunpack.c.l.b16 %v315
    %v835 = vunpack.c.l.b16 %v316
    %v836 = vunpack.c.l.b16 %v317
    %v837 = vunpack.c.l.b16 %v318
    %v838 = vunpack.c.l.b16 %v319
    %v839 = vunpack.c.l.b16 %v320
    %v840 = vunpack.c.l.b16 %v321
    %v841 = vunpack.c.l.b16 %v322
    %v842 = vunpack.c.l.b16 %v323
    %v843 = vunpack.c.l.b16 %v324
    %v844 = vunpack.c.l.b16 %v325
    %v845 = vunpack.c.l.b16 %v326
    %v846 = vunpack.c.l.b16 %v327
    %v847 = vunpack.c.l.b16 %v328
    %v848 = vunpack.c.l.b16 %v329
    %v849 = vunpack.c.l.b16 %v330
    %v850 = vunpack.c.l.b16 %v331
    %v851 = vunpack.c.l.b16 %v332
    %v852 = vunpack.c.l.b16 %v333
    %v853 = vunpack.c.l.b16 %v334
    %v854 = vunpack.c.l.b16 %v335
    %v855 = vunpack.c.l.b16 %v336
    %v856 = vunpack.c.l.b16 %v337
    %v857 = vunpack.c.l.b16 %v338
    %v858 = vunpack.c.l.b16 %v339
    %v859 = vunpack.c.l.b16 %v340
    %v860 = vunpack.c.l.b16 %v341
    %v861 = vunpack.c.l.b16 %v342
    %v862 = vunpack.c.l.b16 %v343
    %v863 = vunpack.c.l.b16 %v344
    %v864 = vunpack.c.l.b16 %v345
    %v865 = vunpack.c.l.b16 %v346
    %v866 = vunpack.c.l.b16 %v347
    %v867 = vunpack.c.l.b16 %v348
    %v868 = vunpack.c.l.b16 %v349
    %v869 = vunpack.c.l.b16 %v350
    %v870 = vunpack.c.l.b16 %v351
    %v871 = vunpack.c.l.b16 %v352
    %v872 = vunpack.c.l.b16 %v353
    %v873 = vunpack.c.l.b16 %v354
    %v874 = vunpack.c.l.b16 %v355
    %v875 = vunpack.c.l.b16 %v356
    %v876 = vunpack.c.l.b16 %v357
    %v877 = vunpack.c.l.b16 %v358
    %v878 = vunpack.c.l.b16 %v359
    %v879 = vunpack.c.l.b16 %v360
    %v880 = vunpack.c.l.b16 %v361
    %v881 = vunpack.c.l.b16 %v362
    %v882 = vunpack.c.l.b16 %v363
    %v883 = vpack.c.b16 %v628, %v627
    %v884 = vpack.c.b16 %v630, %v629
    %v885 = vpack.c.b16 %v632, %v631
    %v886 = vpack.c.b16 %v634, %v633
    %v887 = vpack.c.b16 %v636, %v635
    %v888 = vpack.c.b16 %v638, %v637
    %v889 = vpack.c.b16 %v640, %v639
    %v890 = vpack.c.b16 %v642, %v641
    %v891 = vpack.c.b16 %v644, %v643
    %v892 = vpack.c.b16 %v646, %v645
    %v893 = vpack.c.b16 %v648, %v647
    %v894 = vpack.c.b16 %v650, %v649
    %v895 = vpack.c.b16 %v652, %v651
    %v896 = vpack.c.b16 %v654, %v653
    %v897 = vpack.c.b16 %v656, %v655
    %v898 = vpack.c.b16 %v658, %v657
    %v899 = vpack.c.b16 %v660, %v659
    %v900 = vpack.c.b16 %v662, %v661
    %v901 = vpack.c.b16 %v664, %v663
    %v902 = vpack.c.b16 %v666, %v665
    %v903 = vpack.c.b16 %v668, %v667
    %v904 = vpack.c.b16 %v670, %v669
    %v905 = vpack.c.b16 %v672, %v671
    %v906 = vpack.c.b16 %v674, %v673
    %v907 = vpack.c.b16 %v676, %v675
    %v908 = vpack.c.b16 %v678, %v677
    %v909 = vpack.c.b16 %v680, %v679
    %v910 = vpack.c.b16 %v682, %v681
    %v911 = vpack.c.b16 %v684, %v683
    %v912 = vpack.c.b16 %v686, %v685
    %v913 = vpack.c.b16 %v688, %v687
    %v914 = vpack.c.b16 %v690, %v689
    %v915 = vpack.c.b16 %v692, %v691
    %v916 = vpack.c.b16 %v694, %v693
    %v917 = vpack.c.b16 %v696, %v695
    %v918 = vpack.c.b16 %v698, %v697
    %v919 = vpack.c.b16 %v700, %v699
    %v920 = vpack.c.b16 %v702, %v701
    %v921 = vpack.c.b16 %v704, %v703
    %v922 = vpack.c.b16 %v706, %v705
    %v923 = vpack.c.b16 %v708, %v707
    %v924 = vpack.c.b16 %v710, %v709
    %v925 = vpack.c.b16 %v712, %v711
    %v926 = vpack.c.b16 %v714, %v713
    %v927 = vpack.c.b16 %v716, %v715
    %v928 = vpack.c.b16 %v718, %v717
    %v929 = vpack.c.b16 %v720, %v719
    %v930 = vpack.c.b16 %v722, %v721
    %v931 = vpack.c.b16 %v724, %v723
    %v932 = vpack.c.b16 %v726, %v725
    %v933 = vpack.c.b16 %v728, %v727
    %v934 = vpack.c.b16 %v730, %v729
    %v935 = vpack.c.b16 %v732, %v731
    %v936 = vpack.c.b16 %v734, %v733
    %v937 = vpack.c.b16 %v736, %v735
    %v938 = vpack.c.b16 %v738, %v737
    %v939 = vpack.c.b16 %v740, %v739
    %v940 = vpack.c.b16 %v742, %v741
    %v941 = vpack.c.b16 %v744, %v743
    %v942 = vpack.c.b16 %v746, %v745
    %v943 = vpack.c.b16 %v748, %v747
    %v944 = vpack.c.b16 %v750, %v749
    %v945 = vpack.c.b16 %v752, %v751
    %v946 = vpack.c.b16 %v754, %v753
    %v947 = vpack.c.b16 %v756, %v755
    %v948 = vpack.c.b16 %v758, %v757
    %v949 = vpack.c.b16 %v760, %v759
    %v950 = vpack.c.b16 %v762, %v761
    %v951 = vpack.c.b16 %v764, %v763
    %v952 = vpack.c.b16 %v766, %v765
    %v953 = vpack.c.b16 %v768, %v767
    %v954 = vpack.c.b16 %v770, %v769
    %v955 = vpack.c.b16 %v772, %v771
    %v956 = vpack.c.b16 %v774, %v773
    %v957 = vpack.c.b16 %v776, %v775
    %v958 = vpack.c.b16 %v778, %v777
    %v959 = vpack.c.b16 %v780, %v779
    %v960 = vpack.c.b16 %v782, %v781
    %v961 = vpack.c.b16 %v784, %v783
    %v962 = vpack.c.b16 %v786, %v785
    %v963 = vpack.c.b16 %v788, %v787
    %v964 = vpack.c.b16 %v790, %v789
    %v965 = vpack.c.b16 %v792, %v791
    %v966 = vpack.c.b16 %v794, %v793
    %v967 = vpack.c.b16 %v796, %v795
    %v968 = vpack.c.b16 %v798, %v797
    %v969 = vpack.c.b16 %v800, %v799
    %v970 = vpack.c.b16 %v802, %v801
    %v971 = vpack.c.b16 %v804, %v803
    %v972 = vpack.c.b16 %v806, %v805
    %v973 = vpack.c.b16 %v808, %v807
    %v974 = vpack.c.b16 %v810, %v809
    %v975 = vpack.c.b16 %v812, %v811
    %v976 = vpack.c.b16 %v814, %v813
    %v977 = vpack.c.b16 %v816, %v815
    %v978 = vpack.c.b16 %v818, %v817
    %v979 = vpack.c.b16 %v820, %v819
    %v980 = vpack.c.b16 %v822, %v821
    %v981 = vpack.c.b16 %v824, %v823
    %v982 = vpack.c.b16 %v826, %v825
    %v983 = vpack.c.b16 %v828, %v827
    %v984 = vpack.c.b16 %v830, %v829
    %v985 = vpack.c.b16 %v832, %v831
    %v986 = vpack.c.b16 %v834, %v833
    %v987 = vpack.c.b16 %v836, %v835
    %v988 = vpack.c.b16 %v838, %v837
    %v989 = vpack.c.b16 %v840, %v839
    %v990 = vpack.c.b16 %v842, %v841
    %v991 = vpack.c.b16 %v844, %v843
    %v992 = vpack.c.b16 %v846, %v845
    %v993 = vpack.c.b16 %v848, %v847
    %v994 = vpack.c.b16 %v850, %v849
    %v995 = vpack.c.b16 %v852, %v851
    %v996 = vpack.c.b16 %v854, %v853
    %v997 = vpack.c.b16 %v856, %v855
    %v998 = vpack.c.b16 %v858, %v857
    %v999 = vpack.c.b16 %v860, %v859
    %v1000 = vpack.c.b16 %v862, %v861
    %v1001 = vpack.c.b16 %v864, %v863
    %v1002 = vpack.c.b16 %v866, %v865
    %v1003 = vpack.c.b16 %v868, %v867
    %v1004 = vpack.c.b16 %v870, %v869
    %v1005 = vpack.c.b16 %v872, %v871
    %v1006 = vpack.c.b16 %v874, %v873
    %v1007 = vpack.c.b16 %v876, %v875
    %v1008 = vpack.c.b16 %v878, %v877
    %v1009 = vpack.c.b16 %v880, %v879
    %v1010 = vpack.c.b16 %v882, %v881
    %1139 = vmatprep.subr.bf16.mxu0 0
    %1140 = vmatpush1.bf16.msra.mxu0 %v883
    %1141 = vmatprep.subr.bf16.mxu0 0
    %1142 = vmatpush1.bf16.msra.mxu0 %v884
    %1143 = vmatprep.subr.bf16.mxu0 0
    %1144 = vmatpush1.bf16.msra.mxu0 %v885
    %1145 = vmatprep.subr.bf16.mxu0 0
    %1146 = vmatpush1.bf16.msra.mxu0 %v886
    %1147 = vmatprep.subr.bf16.mxu0 0
    %1148 = vmatpush1.bf16.msra.mxu0 %v887
    %1149 = vmatprep.subr.bf16.mxu0 0
    %1150 = vmatpush1.bf16.msra.mxu0 %v888
    %1151 = vmatprep.subr.bf16.mxu0 0
    %1152 = vmatpush1.bf16.msra.mxu0 %v889
    %1153 = vmatprep.subr.bf16.mxu0 0
    %1154 = vmatpush1.bf16.msra.mxu0 %v890
    %1155 = vmatprep.subr.bf16.mxu0 0
    %1156 = vmatpush1.bf16.msra.mxu0 %v891
    %1157 = vmatprep.subr.bf16.mxu0 0
    %1158 = vmatpush1.bf16.msra.mxu0 %v892
    %1159 = vmatprep.subr.bf16.mxu0 0
    %1160 = vmatpush1.bf16.msra.mxu0 %v893
    %1161 = vmatprep.subr.bf16.mxu0 0
    %1162 = vmatpush1.bf16.msra.mxu0 %v894
    %1163 = vmatprep.subr.bf16.mxu0 0
    %1164 = vmatpush1.bf16.msra.mxu0 %v895
    %1165 = vmatprep.subr.bf16.mxu0 0
    %1166 = vmatpush1.bf16.msra.mxu0 %v896
    %1167 = vmatprep.subr.bf16.mxu0 0
    %1168 = vmatpush1.bf16.msra.mxu0 %v897
    %1169 = vmatprep.subr.bf16.mxu0 0
    %1170 = vmatpush1.bf16.msra.mxu0 %v898
    %1171 = vmatprep.mubr.bf16.mxu0 %v77
    %1172 = vmatmul.mubr.bf16.gmra.mrb[0].mxu0 %v76
    %v1173 = vpop.f32.mrb[0].mxu0
    %v1174 = vadd.f32 %v369, %v1173
    %v1175 = vpop.f32.mrb[0].mxu0
    %v1176 = vpop.f32.mrb[0].mxu0
    %v1177 = vadd.f32 %v369, %v1176
    %v1178 = vpop.f32.mrb[0].mxu0
    %1179 = vdwg.mxu0
    %1180 = vmatprep.subr.bf16.mxu0 0
    %1181 = vmatpush1.bf16.msra.mxu0 %v899
    %1182 = vmatprep.subr.bf16.mxu0 0
    %1183 = vmatpush1.bf16.msra.mxu0 %v900
    %1184 = vmatprep.subr.bf16.mxu0 0
    %1185 = vmatpush1.bf16.msra.mxu0 %v901
    %1186 = vmatprep.subr.bf16.mxu0 0
    %1187 = vmatpush1.bf16.msra.mxu0 %v902
    %1188 = vmatprep.subr.bf16.mxu0 0
    %1189 = vmatpush1.bf16.msra.mxu0 %v903
    %1190 = vmatprep.subr.bf16.mxu0 0
    %1191 = vmatpush1.bf16.msra.mxu0 %v904
    %1192 = vmatprep.subr.bf16.mxu0 0
    %1193 = vmatpush1.bf16.msra.mxu0 %v905
    %1194 = vmatprep.subr.bf16.mxu0 0
    %1195 = vmatpush1.bf16.msra.mxu0 %v906
    %1196 = vmatprep.subr.bf16.mxu0 0
    %1197 = vmatpush1.bf16.msra.mxu0 %v907
    %1198 = vmatprep.subr.bf16.mxu0 0
    %1199 = vmatpush1.bf16.msra.mxu0 %v908
    %1200 = vmatprep.subr.bf16.mxu0 0
    %1201 = vmatpush1.bf16.msra.mxu0 %v909
    %1202 = vmatprep.subr.bf16.mxu0 0
    %1203 = vmatpush1.bf16.msra.mxu0 %v910
    %1204 = vmatprep.subr.bf16.mxu0 0
    %1205 = vmatpush1.bf16.msra.mxu0 %v911
    %1206 = vmatprep.subr.bf16.mxu0 0
    %1207 = vmatpush1.bf16.msra.mxu0 %v912
    %1208 = vmatprep.subr.bf16.mxu0 0
    %1209 = vmatpush1.bf16.msra.mxu0 %v913
    %1210 = vmatprep.subr.bf16.mxu0 0
    %1211 = vmatpush1.bf16.msra.mxu0 %v914
    %1212 = vmatprep.mubr.bf16.mxu0 %v79
    %1213 = vmatmul.mubr.bf16.gmra.mrb[0].mxu0 %v78
    %v1214 = vpop.f32.mrb[0].mxu0
    %v1215 = vadd.f32 %v1174, %v1214
    %v1216 = vpop.f32.mrb[0].mxu0
    %v1217 = vpop.f32.mrb[0].mxu0
    %v1218 = vadd.f32 %v1177, %v1217
    %v1219 = vpop.f32.mrb[0].mxu0
    %1220 = vdwg.mxu0
    %1221 = vmatprep.subr.bf16.mxu0 0
    %1222 = vmatpush1.bf16.msra.mxu0 %v915
    %1223 = vmatprep.subr.bf16.mxu0 0
    %1224 = vmatpush1.bf16.msra.mxu0 %v916
    %1225 = vmatprep.subr.bf16.mxu0 0
    %1226 = vmatpush1.bf16.msra.mxu0 %v917
    %1227 = vmatprep.subr.bf16.mxu0 0
    %1228 = vmatpush1.bf16.msra.mxu0 %v918
    %1229 = vmatprep.subr.bf16.mxu0 0
    %1230 = vmatpush1.bf16.msra.mxu0 %v919
    %1231 = vmatprep.subr.bf16.mxu0 0
    %1232 = vmatpush1.bf16.msra.mxu0 %v920
    %1233 = vmatprep.subr.bf16.mxu0 0
    %1234 = vmatpush1.bf16.msra.mxu0 %v921
    %1235 = vmatprep.subr.bf16.mxu0 0
    %1236 = vmatpush1.bf16.msra.mxu0 %v922
    %1237 = vmatprep.subr.bf16.mxu0 0
    %1238 = vmatpush1.bf16.msra.mxu0 %v923
    %1239 = vmatprep.subr.bf16.mxu0 0
    %1240 = vmatpush1.bf16.msra.mxu0 %v924
    %1241 = vmatprep.subr.bf16.mxu0 0
    %1242 = vmatpush1.bf16.msra.mxu0 %v925
    %1243 = vmatprep.subr.bf16.mxu0 0
    %1244 = vmatpush1.bf16.msra.mxu0 %v926
    %1245 = vmatprep.subr.bf16.mxu0 0
    %1246 = vmatpush1.bf16.msra.mxu0 %v927
    %1247 = vmatprep.subr.bf16.mxu0 0
    %1248 = vmatpush1.bf16.msra.mxu0 %v928
    %1249 = vmatprep.subr.bf16.mxu0 0
    %1250 = vmatpush1.bf16.msra.mxu0 %v929
    %1251 = vmatprep.subr.bf16.mxu0 0
    %1252 = vmatpush1.bf16.msra.mxu0 %v930
    %1253 = vmatprep.mubr.bf16.mxu0 %v81
    %1254 = vmatmul.mubr.bf16.gmra.mrb[0].mxu0 %v80
    %v1255 = vpop.f32.mrb[0].mxu0
    %v1256 = vadd.f32 %v1215, %v1255
    %v1257 = vpop.f32.mrb[0].mxu0
    %v1258 = vpop.f32.mrb[0].mxu0
    %v1259 = vadd.f32 %v1218, %v1258
    %v1260 = vpop.f32.mrb[0].mxu0
    %1261 = vdwg.mxu0
    %1262 = vmatprep.subr.bf16.mxu0 0
    %1263 = vmatpush1.bf16.msra.mxu0 %v931
    %1264 = vmatprep.subr.bf16.mxu0 0
    %1265 = vmatpush1.bf16.msra.mxu0 %v932
    %1266 = vmatprep.subr.bf16.mxu0 0
    %1267 = vmatpush1.bf16.msra.mxu0 %v933
    %1268 = vmatprep.subr.bf16.mxu0 0
    %1269 = vmatpush1.bf16.msra.mxu0 %v934
    %1270 = vmatprep.subr.bf16.mxu0 0
    %1271 = vmatpush1.bf16.msra.mxu0 %v935
    %1272 = vmatprep.subr.bf16.mxu0 0
    %1273 = vmatpush1.bf16.msra.mxu0 %v936
    %1274 = vmatprep.subr.bf16.mxu0 0
    %1275 = vmatpush1.bf16.msra.mxu0 %v937
    %1276 = vmatprep.subr.bf16.mxu0 0
    %1277 = vmatpush1.bf16.msra.mxu0 %v938
    %1278 = vmatprep.subr.bf16.mxu0 0
    %1279 = vmatpush1.bf16.msra.mxu0 %v939
    %1280 = vmatprep.subr.bf16.mxu0 0
    %1281 = vmatpush1.bf16.msra.mxu0 %v940
    %1282 = vmatprep.subr.bf16.mxu0 0
    %1283 = vmatpush1.bf16.msra.mxu0 %v941
    %1284 = vmatprep.subr.bf16.mxu0 0
    %1285 = vmatpush1.bf16.msra.mxu0 %v942
    %1286 = vmatprep.subr.bf16.mxu0 0
    %1287 = vmatpush1.bf16.msra.mxu0 %v943
    %1288 = vmatprep.subr.bf16.mxu0 0
    %1289 = vmatpush1.bf16.msra.mxu0 %v944
    %1290 = vmatprep.subr.bf16.mxu0 0
    %1291 = vmatpush1.bf16.msra.mxu0 %v945
    %1292 = vmatprep.subr.bf16.mxu0 0
    %1293 = vmatpush1.bf16.msra.mxu0 %v946
    %1294 = vmatprep.mubr.bf16.mxu0 %v83
    %1295 = vmatmul.mubr.bf16.gmra.mrb[0].mxu0 %v82
    %v1296 = vpop.f32.mrb[0].mxu0
    %v1297 = vadd.f32 %v1256, %v1296
    %v1298 = vpop.f32.mrb[0].mxu0
    %v1299 = vpop.f32.mrb[0].mxu0
    %v1300 = vadd.f32 %v1259, %v1299
    %v1301 = vpop.f32.mrb[0].mxu0
    %1302 = vdwg.mxu0
    %1303 = vmatprep.subr.bf16.mxu0 0
    %1304 = vmatpush1.bf16.msra.mxu0 %v947
    %1305 = vmatprep.subr.bf16.mxu0 0
    %1306 = vmatpush1.bf16.msra.mxu0 %v948
    %1307 = vmatprep.subr.bf16.mxu0 0
    %1308 = vmatpush1.bf16.msra.mxu0 %v949
    %1309 = vmatprep.subr.bf16.mxu0 0
    %1310 = vmatpush1.bf16.msra.mxu0 %v950
    %1311 = vmatprep.subr.bf16.mxu0 0
    %1312 = vmatpush1.bf16.msra.mxu0 %v951
    %1313 = vmatprep.subr.bf16.mxu0 0
    %1314 = vmatpush1.bf16.msra.mxu0 %v952
    %1315 = vmatprep.subr.bf16.mxu0 0
    %1316 = vmatpush1.bf16.msra.mxu0 %v953
    %1317 = vmatprep.subr.bf16.mxu0 0
    %1318 = vmatpush1.bf16.msra.mxu0 %v954
    %1319 = vmatprep.subr.bf16.mxu0 0
    %1320 = vmatpush1.bf16.msra.mxu0 %v955
    %1321 = vmatprep.subr.bf16.mxu0 0
    %1322 = vmatpush1.bf16.msra.mxu0 %v956
    %1323 = vmatprep.subr.bf16.mxu0 0
    %1324 = vmatpush1.bf16.msra.mxu0 %v957
    %1325 = vmatprep.subr.bf16.mxu0 0
    %1326 = vmatpush1.bf16.msra.mxu0 %v958
    %1327 = vmatprep.subr.bf16.mxu0 0
    %1328 = vmatpush1.bf16.msra.mxu0 %v959
    %1329 = vmatprep.subr.bf16.mxu0 0
    %1330 = vmatpush1.bf16.msra.mxu0 %v960
    %1331 = vmatprep.subr.bf16.mxu0 0
    %1332 = vmatpush1.bf16.msra.mxu0 %v961
    %1333 = vmatprep.subr.bf16.mxu0 0
    %1334 = vmatpush1.bf16.msra.mxu0 %v962
    %1335 = vmatprep.mubr.bf16.mxu0 %v101
    %1336 = vmatmul.mubr.bf16.gmra.mrb[0].mxu0 %v100
    %v1337 = vpop.f32.mrb[0].mxu0
    %v1338 = vadd.f32 %v1297, %v1337
    %v1339 = vpop.f32.mrb[0].mxu0
    %v1340 = vpop.f32.mrb[0].mxu0
    %v1341 = vadd.f32 %v1300, %v1340
    %v1342 = vpop.f32.mrb[0].mxu0
    %1343 = vdwg.mxu0
    %1344 = vmatprep.subr.bf16.mxu0 0
    %1345 = vmatpush1.bf16.msra.mxu0 %v963
    %1346 = vmatprep.subr.bf16.mxu0 0
    %1347 = vmatpush1.bf16.msra.mxu0 %v964
    %1348 = vmatprep.subr.bf16.mxu0 0
    %1349 = vmatpush1.bf16.msra.mxu0 %v965
    %1350 = vmatprep.subr.bf16.mxu0 0
    %1351 = vmatpush1.bf16.msra.mxu0 %v966
    %1352 = vmatprep.subr.bf16.mxu0 0
    %1353 = vmatpush1.bf16.msra.mxu0 %v967
    %1354 = vmatprep.subr.bf16.mxu0 0
    %1355 = vmatpush1.bf16.msra.mxu0 %v968
    %1356 = vmatprep.subr.bf16.mxu0 0
    %1357 = vmatpush1.bf16.msra.mxu0 %v969
    %1358 = vmatprep.subr.bf16.mxu0 0
    %1359 = vmatpush1.bf16.msra.mxu0 %v970
    %1360 = vmatprep.subr.bf16.mxu0 0
    %1361 = vmatpush1.bf16.msra.mxu0 %v971
    %1362 = vmatprep.subr.bf16.mxu0 0
    %1363 = vmatpush1.bf16.msra.mxu0 %v972
    %1364 = vmatprep.subr.bf16.mxu0 0
    %1365 = vmatpush1.bf16.msra.mxu0 %v973
    %1366 = vmatprep.subr.bf16.mxu0 0
    %1367 = vmatpush1.bf16.msra.mxu0 %v974
    %1368 = vmatprep.subr.bf16.mxu0 0
    %1369 = vmatpush1.bf16.msra.mxu0 %v975
    %1370 = vmatprep.subr.bf16.mxu0 0
    %1371 = vmatpush1.bf16.msra.mxu0 %v976
    %1372 = vmatprep.subr.bf16.mxu0 0
    %1373 = vmatpush1.bf16.msra.mxu0 %v977
    %1374 = vmatprep.subr.bf16.mxu0 0
    %1375 = vmatpush1.bf16.msra.mxu0 %v978
    %1376 = vmatprep.mubr.bf16.mxu0 %v103
    %1377 = vmatmul.mubr.bf16.gmra.mrb[0].mxu0 %v102
    %v1378 = vpop.f32.mrb[0].mxu0
    %v1379 = vadd.f32 %v1338, %v1378
    %v1380 = vpop.f32.mrb[0].mxu0
    %v1381 = vpop.f32.mrb[0].mxu0
    %v1382 = vadd.f32 %v1341, %v1381
    %v1383 = vpop.f32.mrb[0].mxu0
    %1384 = vdwg.mxu0
    %1385 = vmatprep.subr.bf16.mxu0 0
    %1386 = vmatpush1.bf16.msra.mxu0 %v979
    %1387 = vmatprep.subr.bf16.mxu0 0
    %1388 = vmatpush1.bf16.msra.mxu0 %v980
    %1389 = vmatprep.subr.bf16.mxu0 0
    %1390 = vmatpush1.bf16.msra.mxu0 %v981
    %1391 = vmatprep.subr.bf16.mxu0 0
    %1392 = vmatpush1.bf16.msra.mxu0 %v982
    %1393 = vmatprep.subr.bf16.mxu0 0
    %1394 = vmatpush1.bf16.msra.mxu0 %v983
    %1395 = vmatprep.subr.bf16.mxu0 0
    %1396 = vmatpush1.bf16.msra.mxu0 %v984
    %1397 = vmatprep.subr.bf16.mxu0 0
    %1398 = vmatpush1.bf16.msra.mxu0 %v985
    %1399 = vmatprep.subr.bf16.mxu0 0
    %1400 = vmatpush1.bf16.msra.mxu0 %v986
    %1401 = vmatprep.subr.bf16.mxu0 0
    %1402 = vmatpush1.bf16.msra.mxu0 %v987
    %1403 = vmatprep.subr.bf16.mxu0 0
    %1404 = vmatpush1.bf16.msra.mxu0 %v988
    %1405 = vmatprep.subr.bf16.mxu0 0
    %1406 = vmatpush1.bf16.msra.mxu0 %v989
    %1407 = vmatprep.subr.bf16.mxu0 0
    %1408 = vmatpush1.bf16.msra.mxu0 %v990
    %1409 = vmatprep.subr.bf16.mxu0 0
    %1410 = vmatpush1.bf16.msra.mxu0 %v991
    %1411 = vmatprep.subr.bf16.mxu0 0
    %1412 = vmatpush1.bf16.msra.mxu0 %v992
    %1413 = vmatprep.subr.bf16.mxu0 0
    %1414 = vmatpush1.bf16.msra.mxu0 %v993
    %1415 = vmatprep.subr.bf16.mxu0 0
    %1416 = vmatpush1.bf16.msra.mxu0 %v994
    %1417 = vmatprep.mubr.bf16.mxu0 %v105
    %1418 = vmatmul.mubr.bf16.gmra.mrb[0].mxu0 %v104
    %v1419 = vpop.f32.mrb[0].mxu0
    %v1420 = vadd.f32 %v1379, %v1419
    %v1421 = vpop.f32.mrb[0].mxu0
    %v1422 = vpop.f32.mrb[0].mxu0
    %v1423 = vadd.f32 %v1382, %v1422
    %v1424 = vpop.f32.mrb[0].mxu0
    %1425 = vdwg.mxu0
    %1426 = vmatprep.subr.bf16.mxu0 0
    %1427 = vmatpush1.bf16.msra.mxu0 %v995
    %1428 = vmatprep.subr.bf16.mxu0 0
    %1429 = vmatpush1.bf16.msra.mxu0 %v996
    %1430 = vmatprep.subr.bf16.mxu0 0
    %1431 = vmatpush1.bf16.msra.mxu0 %v997
    %1432 = vmatprep.subr.bf16.mxu0 0
    %1433 = vmatpush1.bf16.msra.mxu0 %v998
    %1434 = vmatprep.subr.bf16.mxu0 0
    %1435 = vmatpush1.bf16.msra.mxu0 %v999
    %1436 = vmatprep.subr.bf16.mxu0 0
    %1437 = vmatpush1.bf16.msra.mxu0 %v1000
    %1438 = vmatprep.subr.bf16.mxu0 0
    %1439 = vmatpush1.bf16.msra.mxu0 %v1001
    %1440 = vmatprep.subr.bf16.mxu0 0
    %1441 = vmatpush1.bf16.msra.mxu0 %v1002
    %1442 = vmatprep.subr.bf16.mxu0 0
    %1443 = vmatpush1.bf16.msra.mxu0 %v1003
    %1444 = vmatprep.subr.bf16.mxu0 0
    %1445 = vmatpush1.bf16.msra.mxu0 %v1004
    %1446 = vmatprep.subr.bf16.mxu0 0
    %1447 = vmatpush1.bf16.msra.mxu0 %v1005
    %1448 = vmatprep.subr.bf16.mxu0 0
    %1449 = vmatpush1.bf16.msra.mxu0 %v1006
    %1450 = vmatprep.subr.bf16.mxu0 0
    %1451 = vmatpush1.bf16.msra.mxu0 %v1007
    %1452 = vmatprep.subr.bf16.mxu0 0
    %1453 = vmatpush1.bf16.msra.mxu0 %v1008
    %1454 = vmatprep.subr.bf16.mxu0 0
    %1455 = vmatpush1.bf16.msra.mxu0 %v1009
    %1456 = vmatprep.subr.bf16.mxu0 0
    %1457 = vmatpush1.bf16.msra.mxu0 %v1010
    %1458 = vmatprep.mubr.bf16.mxu0 %v107
    %1459 = vmatmul.mubr.bf16.gmra.mrb[0].mxu0 %v106
    %v1460 = vpop.f32.mrb[0].mxu0
    %v1461 = vadd.f32 %v1420, %v1460
    %v1462 = vpop.f32.mrb[0].mxu0
    %v1463 = vpop.f32.mrb[0].mxu0
    %v1464 = vadd.f32 %v1423, %v1463
    %v1465 = vpop.f32.mrb[0].mxu0
    %1466 = vdwg.mxu0
    %1467 = vst [vmem:[#allocation8] sm:$0xff] %v1461
    %1468 = vst [vmem:[#allocation8 + $0x8] sm:$0xff] %v1464
    // Predicated region
    $region30: #{tpu_custom_call.1} parent=1 // pred_check
      _
    $region31: #{tpu_custom_call.1} parent=1 // pred_check_branch
      %1470 = sbr.rel (0) target = $region33
    $region32: #{tpu_custom_call.1} parent=1 // pred_region
      %s1472 = ssub.s32 256, 256
      %1473 = vsyncadd [#allocation4], %s1472
      %s1474 = sshll.u32 [#allocation8], 4
      %s1475 = int_to_ptr.vmem [resolvable:$true] %s1474
      %1480 = dma.vmem_to_hbm [thread:$0]  %s1475, 256, %s4, [#allocation4], 128, 128, 8
    $region33: #{tpu_custom_call.1} parent=1 // pred_fallthru
      _
    // Predicated region
    $region34: #{tpu_custom_call.1} parent=1 // pred_check
      _
    $region35: #{tpu_custom_call.1} parent=1 // pred_check_branch
      %1482 = sbr.rel (0) target = $region37
    $region36: #{tpu_custom_call.1} parent=1 // pred_region
      %1483 = dma.done [#allocation4], 256
    $region37: #{tpu_custom_call.1} parent=1 // pred_fallthru
      _
    %1484 = vsyncpa [#allocation3], 1
    %1485 = vsyncpa [#allocation6], 1
    %1486 = vsyncpa [#allocation4], 1

</llo_original>
